<compile_context>
chip_gen: v5e
topology: v5e:2x2
jax: 0.10.0
libtpu: 0.0.40
codegen_flags: <defaults>
</compile_context>

<pallas_src>
import jax
import jax.numpy as jnp
from jax.experimental import pallas as pl
from jax.experimental.pallas import tpu as pltpu


_LANE_WIDTHS = (4096, 2048, 1024, 512, 256, 128)   # multiples of 128, widest first
_TARGET_TILE_BYTES = 4 * 1024 * 1024                # ~4 MiB blocks
_VMEM_LIMIT_BYTES = 32 * 1024 * 1024                # safe on v5e / v6e / v7x


def _identity_kernel(x_ref, o_ref):
    # Pure tile pass-through: one vector load + one vector store per vreg.
    o_ref[...] = x_ref[...]


def _copy_2d(x2):
    """Tiled Pallas identity copy of a 2-D lane-dense array."""
    R, C = x2.shape
    itemsize = jnp.dtype(x2.dtype).itemsize

    # Rows per block: ~4 MiB tiles, multiple of 8 sublanes (or full extent).
    tr = _TARGET_TILE_BYTES // (C * itemsize)
    tr = max(8, (tr // 8) * 8)
    if tr >= R:
        tr = R                      # full-extent block (always legal)
    grid = (pl.cdiv(R, tr),)        # ragged last block is masked, never dropped

    return pl.pallas_call(
        _identity_kernel,
        out_shape=jax.ShapeDtypeStruct((R, C), x2.dtype),
        grid_spec=pltpu.PrefetchScalarGridSpec(
            num_scalar_prefetch=0,
            grid=grid,
            in_specs=[pl.BlockSpec((tr, C), lambda i: (i, 0))],
            out_specs=pl.BlockSpec((tr, C), lambda i: (i, 0)),
        ),
        input_output_aliases={0: 0},   # identity: reuse the input HBM buffer
        compiler_params=pltpu.CompilerParams(
            dimension_semantics=("parallel",),   # row blocks shard across v7x TCs
            vmem_limit_bytes=_VMEM_LIMIT_BYTES,
        ),
    )(x2)


def base_model_forward(x):
    """Identity forward of BaseModel, run as a single Pallas TPU copy kernel.

    Accepts any-rank input (e.g. NCHW). Returns an array with identical
    shape/dtype/values.
    """
    orig_shape = x.shape
    size = x.size
    if size == 0:
        return x

    flat = x.reshape(-1)

    # Lane-dense layout: widest lane width that exactly divides the element
    # count -> zero padding, zero extra HBM passes.
    lanes = next((c for c in _LANE_WIDTHS if size % c == 0), None)
    if lanes is not None:
        out = _copy_2d(flat.reshape(size // lanes, lanes))
        return out.reshape(orig_shape)

    # Fallback (size not a multiple of 128): pad at most one row's worth.
    lanes = 1024
    padded_size = pl.cdiv(size, lanes) * lanes
    flat_p = jnp.pad(flat, (0, padded_size - size))
    out = _copy_2d(flat_p.reshape(padded_size // lanes, lanes))
    return out.reshape(-1)[:size].reshape(orig_shape)


def get_parameter_count(params=()):
    """Equivalent of BaseModel.get_parameter_count(): sum of parameter sizes.

    BaseModel.__init__ registers no parameters, so this is 0 for the base
    class itself.
    """
    return sum(int(p.size) for p in params)


if __name__ == "__main__":
    key = jax.random.PRNGKey(0)
    # Small NCHW input consistent with a vision-style subclass: (2, 4, 16, 16).
    x = jax.random.normal(key, (2, 4, 16, 16), dtype=jnp.float32)
    x_host = jax.device_get(x)          # reference copy (input is donated below)

    # Donate the input so input_output_aliases actually collapses the pass to
    # a single in-place HBM stream (the realistic in-graph usage).
    fwd = jax.jit(base_model_forward, donate_argnums=0)
    y = jax.block_until_ready(fwd(x))

    assert y.shape == x_host.shape, "shape mismatch"
    assert y.dtype == x_host.dtype, "dtype mismatch"
    assert bool(jnp.allclose(y, x_host)), "identity forward mismatch"
    assert get_parameter_count() == 0

    print("KERNEL_OK")
</pallas_src>

<mosaic_0001>
module attributes {stable_mosaic.version = 11 : i64} {
  func.func @_identity_kernel(%arg0: i32, %arg1: memref<1x2048xf32, #tpu.memory_space<vmem>>, %arg2: memref<1x2048xf32, #tpu.memory_space<vmem>>) attributes {dimension_semantics = [#tpu.dimension_semantics<parallel>], iteration_bounds = array<i64: 1>, scalar_prefetch = 0 : i64, scratch_operands = 0 : i64, tpu.core_type = #tpu.core_type<tc>, window_params = [{transform_indices = @transform_0, window_bounds = array<i64: 1, 2048>}, {transform_indices = @transform_1, window_bounds = array<i64: 1, 2048>}]} {
    %c0 = arith.constant 0 : index
    %c0_0 = arith.constant 0 : index
    %0 = vector.load %arg1[%c0, %c0_0] : memref<1x2048xf32, #tpu.memory_space<vmem>>, vector<1x2048xf32>
    %c0_1 = arith.constant 0 : index
    %c0_2 = arith.constant 0 : index
    %1 = vector.load %arg2[%c0_1, %c0_2] : memref<1x2048xf32, #tpu.memory_space<vmem>>, vector<1x2048xf32>
    tpu.vector_store %arg2[%c0_1, %c0_2], %0 {strides = array<i32>} : memref<1x2048xf32, #tpu.memory_space<vmem>>, vector<1x2048xf32>,
    return
  }
  func.func @transform_0(%arg0: i32) -> (i32, i32) {
    %c0_i32 = arith.constant 0 : i32
    %c0_i32_0 = arith.constant 0 : i32
    return %arg0, %c0_i32 : i32, i32
  }
  func.func @transform_1(%arg0: i32) -> (i32, i32) {
    %c0_i32 = arith.constant 0 : i32
    %c0_i32_0 = arith.constant 0 : i32
    return %arg0, %c0_i32 : i32, i32
  }
}

</mosaic_0001>

<llo_original>
// kernel: base_model_forward.1
$region0: #{base_model_forward.1}
  #allocation0 [shape = 'u32[]', space=smem, size = 0x4, offset = 0x4, fixed_abs, tag = 'smem constant byte address 0x4 - core index']
  #allocation1 [shape = 'u32[72,128]{1,0:T(1,128)}', space=vmem, size = 0x9000, scoped, tag = 'internal scratch']
  %s0 = inlined_call_operand.vmem [shape: f32[1,2048], index: 0, kind: input, shape index: {}, may-alias: {0,1}]
  %s1 = inlined_call_operand.vmem [shape: f32[1,2048], index: 1, kind: output, shape index: {}, may-alias: {0,1}]
  %s2 = sld [smem:[#allocation0]]
  $region14: #{base_model_forward.1} parent=0
    _
  %s4 = ssub.s32 1, %s2
  %s5 = scalar_select 0, %s4, %s2
  // Predicated region
  $region2: #{base_model_forward.1} parent=0 // pred_check
    _
  $region3: #{base_model_forward.1} parent=0 // pred_check_branch
    %7 = sbr.rel (0) target = $region5
  $region4: #{base_model_forward.1} parent=0 // pred_region
    _
  $region5: #{base_model_forward.1} parent=0 // pred_fallthru
    _
  %v8 = vld [vmem:[%s0] sm:$0xff]
  %v9 = vld [vmem:[%s0 + $0x8] sm:$0xff]
  %10 = vst [vmem:[%s1] sm:$0xff] %v8
  %11 = vst [vmem:[%s1 + $0x8] sm:$0xff] %v9
  // Predicated region
  $region6: #{base_model_forward.1} parent=0 // pred_check
    _
  $region7: #{base_model_forward.1} parent=0 // pred_check_branch
    %13 = sbr.rel (0) target = $region9
  $region8: #{base_model_forward.1} parent=0 // pred_region
    _
  $region9: #{base_model_forward.1} parent=0 // pred_fallthru
    _
  // Predicated region
  $region10: #{base_model_forward.1} parent=0 // pred_check
    _
  $region11: #{base_model_forward.1} parent=0 // pred_check_branch
    %15 = sbr.rel (0) target = $region13
  $region12: #{base_model_forward.1} parent=0 // pred_region
    _
  $region13: #{base_model_forward.1} parent=0 // pred_fallthru
    _

</llo_original>
